<compile_context>
chip_gen: v7x
topology: tpu7x:2x2x1
jax: 0.10.0
libtpu: 0.0.40
codegen_flags: <defaults>
</compile_context>

<pallas_src>
import functools
import math

import jax
import jax.numpy as jnp
from jax.experimental import pallas as pl
from jax.experimental.pallas import tpu as pltpu


def _convblock_kernel(x_ref, w_ref, scale_ref, shift_ref, out_ref,
                      *, tile_p, wp, cin, cout):
    """One tile of `tile_p` flattened (padded) output pixels.

    x_ref:     (Cin,  P_in)    bf16  whole padded input, VMEM-resident
    w_ref:     (Cout, 9*Cin)   bf16  tap-major (dh, dw) then ci
    scale_ref: (Cout, 1)       f32   folded BN scale
    shift_ref: (Cout, 1)       f32   folded conv-bias + BN shift
    out_ref:   (Cout, tile_p)  f32
    """
    i = pl.program_id(0)
    start = pl.multiple_of(i * tile_p, 128)
    halo = 2 * wp + 2
    # One aligned dynamic lane-slice; the 9 conv taps are static shifts of it.
    window = x_ref[:, pl.ds(start, tile_p + halo)]            # (Cin, TP+halo)
    w = w_ref[...]                                            # (Cout, 9*Cin)

    acc = jnp.zeros((cout, tile_p), jnp.float32)
    for dh in range(3):
        for dw in range(3):
            t = dh * 3 + dw
            s = dh * wp + dw
            acc = acc + jnp.dot(
                w[:, t * cin:(t + 1) * cin],                  # (Cout, Cin) bf16
                window[:, s:s + tile_p],                      # (Cin, TP)   bf16
                preferred_element_type=jnp.float32)

    y = acc * scale_ref[...] + shift_ref[...]                 # folded BN + bias
    out_ref[...] = jnp.maximum(y, 0.0)                        # ReLU


def fused_conv_bn_relu(x, w_mat, scale, shift, *, tile_p=512):
    """x: (N, Cin, H, W) f32.  w_mat: (Cout, 9*Cin) bf16 (tap-major).
    scale/shift: (Cout, 1) f32.  Returns (N, Cout, H, W) f32."""
    assert tile_p % 128 == 0
    n, cin, h, w = x.shape
    cout = w_mat.shape[0]
    hp, wp = h + 2, w + 2

    # Pad spatially (conv padding=1), go to (Cin, flat padded pixel) layout.
    xpad = jnp.pad(x, ((0, 0), (0, 0), (1, 1), (1, 1)))
    x2 = (xpad.transpose(1, 0, 2, 3)
              .reshape(cin, n * hp * wp)
              .astype(jnp.bfloat16))

    p_full = n * hp * wp
    num_tiles = -(-p_full // tile_p)                 # cdiv, no divisibility req
    p_out = num_tiles * tile_p
    halo = 2 * wp + 2
    p_in = ((p_out + halo + 127) // 128) * 128       # room for last tile's halo
    x2 = jnp.pad(x2, ((0, 0), (0, p_in - p_full)))

    kernel = functools.partial(_convblock_kernel,
                               tile_p=tile_p, wp=wp, cin=cin, cout=cout)

    grid_spec = pltpu.PrefetchScalarGridSpec(
        num_scalar_prefetch=0,
        grid=(num_tiles,),
        in_specs=[
            pl.BlockSpec((cin, p_in), lambda i: (0, 0)),      # resident input
            pl.BlockSpec((cout, 9 * cin), lambda i: (0, 0)),  # weights
            pl.BlockSpec((cout, 1), lambda i: (0, 0)),        # BN scale
            pl.BlockSpec((cout, 1), lambda i: (0, 0)),        # BN shift
        ],
        out_specs=pl.BlockSpec((cout, tile_p), lambda i: (0, i)),
    )

    out = pl.pallas_call(
        kernel,
        out_shape=jax.ShapeDtypeStruct((cout, p_out), jnp.float32),
        grid_spec=grid_spec,
        compiler_params=pltpu.CompilerParams(
            dimension_semantics=("parallel",)),
    )(x2, w_mat, scale, shift)

    # Gather the valid (non-halo, non-tail) output pixels back into NCHW.
    y = out[:, :p_full].reshape(cout, n, hp, wp)[:, :, :h, :w]
    return y.transpose(1, 0, 2, 3)


class ConvBlockPallas:
    """Pallas equivalent of ConvBlock(ch_in, ch_out):
    Conv2d(3x3, s=1, p=1, bias=True) -> BatchNorm2d -> ReLU."""

    def __init__(self, key, ch_in, ch_out, eps=1e-5):
        self.cin, self.cout, self.eps = ch_in, ch_out, eps
        kw_, kb, kg, kbt, km, kv = jax.random.split(key, 6)
        fanin = ch_in * 9
        self.w = jax.random.normal(kw_, (ch_out, ch_in, 3, 3),
                                   jnp.float32) * math.sqrt(2.0 / fanin)
        self.b = 0.1 * jax.random.normal(kb, (ch_out,), jnp.float32)
        self.gamma = 1.0 + 0.1 * jax.random.normal(kg, (ch_out,), jnp.float32)
        self.beta = 0.1 * jax.random.normal(kbt, (ch_out,), jnp.float32)
        self.running_mean = 0.1 * jax.random.normal(km, (ch_out,), jnp.float32)
        self.running_var = jax.random.uniform(kv, (ch_out,), jnp.float32,
                                              minval=0.5, maxval=1.5)

        # Kernel-side parameters.
        # (Cout, Cin, 3, 3) -> (Cout, (dh, dw, ci)) tap-major, bf16 for the MXU.
        self.w_mat = (self.w.transpose(0, 2, 3, 1)
                      .reshape(ch_out, 9 * ch_in).astype(jnp.bfloat16))
        inv_std = 1.0 / jnp.sqrt(self.running_var + eps)
        scale = self.gamma * inv_std
        shift = self.beta + (self.b - self.running_mean) * scale
        self.scale = scale.reshape(ch_out, 1).astype(jnp.float32)
        self.shift = shift.reshape(ch_out, 1).astype(jnp.float32)

    def __call__(self, x, tile_p=512):
        # TODO(synk): training-mode BatchNorm (per-batch statistics) needs an
        # extra reduction pass; BN is applied here in inference form (running
        # stats) folded into the conv epilogue.
        return fused_conv_bn_relu(x, self.w_mat, self.scale, self.shift,
                                  tile_p=tile_p)

    def reference(self, x):
        """Pure-JAX reference using the same bf16-rounded operands."""
        xb = x.astype(jnp.bfloat16).astype(jnp.float32)
        wb = (self.w_mat.astype(jnp.float32)
              .reshape(self.cout, 3, 3, self.cin)
              .transpose(0, 3, 1, 2))                       # (Cout, Cin, 3, 3)
        conv = jax.lax.conv_general_dilated(
            xb, wb, window_strides=(1, 1), padding=[(1, 1), (1, 1)],
            dimension_numbers=("NCHW", "OIHW", "NCHW"))
        conv = conv + self.b.reshape(1, -1, 1, 1)
        yn = (self.gamma.reshape(1, -1, 1, 1)
              * (conv - self.running_mean.reshape(1, -1, 1, 1))
              / jnp.sqrt(self.running_var.reshape(1, -1, 1, 1) + self.eps)
              + self.beta.reshape(1, -1, 1, 1))
        return jnp.maximum(yn, 0.0)


if __name__ == "__main__":
    key = jax.random.PRNGKey(0)
    k_params, k_x = jax.random.split(key)

    N, Cin, H, W, Cout = 2, 4, 16, 16, 8
    block = ConvBlockPallas(k_params, Cin, Cout)

    x = jax.random.normal(k_x, (N, Cin, H, W), jnp.float32)

    y = block(x)
    y = jax.block_until_ready(y)

    ref = block.reference(x)
    assert y.shape == (N, Cout, H, W)
    max_err = jnp.max(jnp.abs(y - ref))
    assert jnp.allclose(y, ref, atol=1e-2, rtol=1e-2), float(max_err)

    print("KERNEL_OK")
</pallas_src>

<mosaic_0001>
module attributes {stable_mosaic.version = 11 : i64} {
  func.func @_convblock_kernel(%arg0: i32, %arg1: memref<4x1152xbf16, #tpu.memory_space<vmem>>, %arg2: memref<8x36xbf16, #tpu.memory_space<vmem>>, %arg3: memref<8x1xf32, #tpu.memory_space<vmem>>, %arg4: memref<8x1xf32, #tpu.memory_space<vmem>>, %arg5: memref<8x512xf32, #tpu.memory_space<vmem>>) attributes {dimension_semantics = [#tpu.dimension_semantics<parallel>], iteration_bounds = array<i64: 2>, scalar_prefetch = 0 : i64, scratch_operands = 0 : i64, tpu.core_type = #tpu.core_type<tc>, window_params = [{pipeline_mode = #tpu.pipeline_mode<synchronous>, transform_indices = @transform_0, window_bounds = array<i64: 4, 1152>}, {pipeline_mode = #tpu.pipeline_mode<synchronous>, transform_indices = @transform_1, window_bounds = array<i64: 8, 36>}, {pipeline_mode = #tpu.pipeline_mode<synchronous>, transform_indices = @transform_2, window_bounds = array<i64: 8, 1>}, {pipeline_mode = #tpu.pipeline_mode<synchronous>, transform_indices = @transform_3, window_bounds = array<i64: 8, 1>}, {transform_indices = @transform_4, window_bounds = array<i64: 8, 512>}]} {
    %c512_i32 = arith.constant 512 : i32
    %0 = arith.muli %arg0, %c512_i32 : i32
    %1 = tpu.assume_multiple %0, 128 : i32
    %c0 = arith.constant 0 : index
    %2 = arith.index_cast %1 : i32 to index
    %3 = vector.load %arg1[%c0, %2] : memref<4x1152xbf16, #tpu.memory_space<vmem>>, vector<4x550xbf16>
    %c0_0 = arith.constant 0 : index
    %c0_1 = arith.constant 0 : index
    %4 = vector.load %arg2[%c0_0, %c0_1] : memref<8x36xbf16, #tpu.memory_space<vmem>>, vector<8x36xbf16>
    %cst = arith.constant 0.000000e+00 : f32
    %5 = vector.broadcast %cst : f32 to vector<8x512xf32>
    %6 = vector.extract_strided_slice %4 {offsets = [0, 0], sizes = [8, 4], strides = [1, 1]} : vector<8x36xbf16> to vector<8x4xbf16>
    %7 = vector.extract_strided_slice %3 {offsets = [0, 0], sizes = [4, 512], strides = [1, 1]} : vector<4x550xbf16> to vector<4x512xbf16>
    %cst_2 = arith.constant dense<0.000000e+00> : vector<8x512xf32>
    %8 = tpu.matmul %6, %7, %cst_2 {dimension_numbers = #tpu.dot_dimension_numbers<[1], [0], [0], [1], [0, 0, 1, 1], [], []>} : vector<8x4xbf16>, vector<4x512xbf16>, vector<8x512xf32> -> vector<8x512xf32>
    %9 = arith.addf %5, %8 : vector<8x512xf32>
    %10 = vector.extract_strided_slice %4 {offsets = [0, 4], sizes = [8, 4], strides = [1, 1]} : vector<8x36xbf16> to vector<8x4xbf16>
    %11 = vector.extract_strided_slice %3 {offsets = [0, 1], sizes = [4, 512], strides = [1, 1]} : vector<4x550xbf16> to vector<4x512xbf16>
    %cst_3 = arith.constant dense<0.000000e+00> : vector<8x512xf32>
    %12 = tpu.matmul %10, %11, %cst_3 {dimension_numbers = #tpu.dot_dimension_numbers<[1], [0], [0], [1], [0, 0, 1, 1], [], []>} : vector<8x4xbf16>, vector<4x512xbf16>, vector<8x512xf32> -> vector<8x512xf32>
    %13 = arith.addf %9, %12 : vector<8x512xf32>
    %14 = vector.extract_strided_slice %4 {offsets = [0, 8], sizes = [8, 4], strides = [1, 1]} : vector<8x36xbf16> to vector<8x4xbf16>
    %15 = vector.extract_strided_slice %3 {offsets = [0, 2], sizes = [4, 512], strides = [1, 1]} : vector<4x550xbf16> to vector<4x512xbf16>
    %cst_4 = arith.constant dense<0.000000e+00> : vector<8x512xf32>
    %16 = tpu.matmul %14, %15, %cst_4 {dimension_numbers = #tpu.dot_dimension_numbers<[1], [0], [0], [1], [0, 0, 1, 1], [], []>} : vector<8x4xbf16>, vector<4x512xbf16>, vector<8x512xf32> -> vector<8x512xf32>
    %17 = arith.addf %13, %16 : vector<8x512xf32>
    %18 = vector.extract_strided_slice %4 {offsets = [0, 12], sizes = [8, 4], strides = [1, 1]} : vector<8x36xbf16> to vector<8x4xbf16>
    %19 = vector.extract_strided_slice %3 {offsets = [0, 18], sizes = [4, 512], strides = [1, 1]} : vector<4x550xbf16> to vector<4x512xbf16>
    %cst_5 = arith.constant dense<0.000000e+00> : vector<8x512xf32>
    %20 = tpu.matmul %18, %19, %cst_5 {dimension_numbers = #tpu.dot_dimension_numbers<[1], [0], [0], [1], [0, 0, 1, 1], [], []>} : vector<8x4xbf16>, vector<4x512xbf16>, vector<8x512xf32> -> vector<8x512xf32>
    %21 = arith.addf %17, %20 : vector<8x512xf32>
    %22 = vector.extract_strided_slice %4 {offsets = [0, 16], sizes = [8, 4], strides = [1, 1]} : vector<8x36xbf16> to vector<8x4xbf16>
    %23 = vector.extract_strided_slice %3 {offsets = [0, 19], sizes = [4, 512], strides = [1, 1]} : vector<4x550xbf16> to vector<4x512xbf16>
    %cst_6 = arith.constant dense<0.000000e+00> : vector<8x512xf32>
    %24 = tpu.matmul %22, %23, %cst_6 {dimension_numbers = #tpu.dot_dimension_numbers<[1], [0], [0], [1], [0, 0, 1, 1], [], []>} : vector<8x4xbf16>, vector<4x512xbf16>, vector<8x512xf32> -> vector<8x512xf32>
    %25 = arith.addf %21, %24 : vector<8x512xf32>
    %26 = vector.extract_strided_slice %4 {offsets = [0, 20], sizes = [8, 4], strides = [1, 1]} : vector<8x36xbf16> to vector<8x4xbf16>
    %27 = vector.extract_strided_slice %3 {offsets = [0, 20], sizes = [4, 512], strides = [1, 1]} : vector<4x550xbf16> to vector<4x512xbf16>
    %cst_7 = arith.constant dense<0.000000e+00> : vector<8x512xf32>
    %28 = tpu.matmul %26, %27, %cst_7 {dimension_numbers = #tpu.dot_dimension_numbers<[1], [0], [0], [1], [0, 0, 1, 1], [], []>} : vector<8x4xbf16>, vector<4x512xbf16>, vector<8x512xf32> -> vector<8x512xf32>
    %29 = arith.addf %25, %28 : vector<8x512xf32>
    %30 = vector.extract_strided_slice %4 {offsets = [0, 24], sizes = [8, 4], strides = [1, 1]} : vector<8x36xbf16> to vector<8x4xbf16>
    %31 = vector.extract_strided_slice %3 {offsets = [0, 36], sizes = [4, 512], strides = [1, 1]} : vector<4x550xbf16> to vector<4x512xbf16>
    %cst_8 = arith.constant dense<0.000000e+00> : vector<8x512xf32>
    %32 = tpu.matmul %30, %31, %cst_8 {dimension_numbers = #tpu.dot_dimension_numbers<[1], [0], [0], [1], [0, 0, 1, 1], [], []>} : vector<8x4xbf16>, vector<4x512xbf16>, vector<8x512xf32> -> vector<8x512xf32>
    %33 = arith.addf %29, %32 : vector<8x512xf32>
    %34 = vector.extract_strided_slice %4 {offsets = [0, 28], sizes = [8, 4], strides = [1, 1]} : vector<8x36xbf16> to vector<8x4xbf16>
    %35 = vector.extract_strided_slice %3 {offsets = [0, 37], sizes = [4, 512], strides = [1, 1]} : vector<4x550xbf16> to vector<4x512xbf16>
    %cst_9 = arith.constant dense<0.000000e+00> : vector<8x512xf32>
    %36 = tpu.matmul %34, %35, %cst_9 {dimension_numbers = #tpu.dot_dimension_numbers<[1], [0], [0], [1], [0, 0, 1, 1], [], []>} : vector<8x4xbf16>, vector<4x512xbf16>, vector<8x512xf32> -> vector<8x512xf32>
    %37 = arith.addf %33, %36 : vector<8x512xf32>
    %38 = vector.extract_strided_slice %4 {offsets = [0, 32], sizes = [8, 4], strides = [1, 1]} : vector<8x36xbf16> to vector<8x4xbf16>
    %39 = vector.extract_strided_slice %3 {offsets = [0, 38], sizes = [4, 512], strides = [1, 1]} : vector<4x550xbf16> to vector<4x512xbf16>
    %cst_10 = arith.constant dense<0.000000e+00> : vector<8x512xf32>
    %40 = tpu.matmul %38, %39, %cst_10 {dimension_numbers = #tpu.dot_dimension_numbers<[1], [0], [0], [1], [0, 0, 1, 1], [], []>} : vector<8x4xbf16>, vector<4x512xbf16>, vector<8x512xf32> -> vector<8x512xf32>
    %41 = arith.addf %37, %40 : vector<8x512xf32>
    %c0_11 = arith.constant 0 : index
    %c0_12 = arith.constant 0 : index
    %42 = vector.load %arg3[%c0_11, %c0_12] : memref<8x1xf32, #tpu.memory_space<vmem>>, vector<8x1xf32>
    %43 = vector.broadcast %42 : vector<8x1xf32> to vector<8x512xf32>
    %44 = arith.mulf %41, %43 : vector<8x512xf32>
    %c0_13 = arith.constant 0 : index
    %c0_14 = arith.constant 0 : index
    %45 = vector.load %arg4[%c0_13, %c0_14] : memref<8x1xf32, #tpu.memory_space<vmem>>, vector<8x1xf32>
    %46 = vector.broadcast %45 : vector<8x1xf32> to vector<8x512xf32>
    %47 = arith.addf %44, %46 : vector<8x512xf32>
    %cst_15 = arith.constant 0.000000e+00 : f32
    %48 = vector.broadcast %cst_15 : f32 to vector<8x512xf32>
    %49 = arith.maximumf %47, %48 : vector<8x512xf32>
    %c0_16 = arith.constant 0 : index
    %c0_17 = arith.constant 0 : index
    %50 = vector.load %arg5[%c0_16, %c0_17] : memref<8x512xf32, #tpu.memory_space<vmem>>, vector<8x512xf32>
    tpu.vector_store %arg5[%c0_16, %c0_17], %49 {strides = array<i32>} : memref<8x512xf32, #tpu.memory_space<vmem>>, vector<8x512xf32>,
    return
  }
  func.func @transform_0(%arg0: i32) -> (i32, i32) {
    %c0_i32 = arith.constant 0 : i32
    %c0_i32_0 = arith.constant 0 : i32
    %c0_i32_1 = arith.constant 0 : i32
    return %c0_i32, %c0_i32_0 : i32, i32
  }
  func.func @transform_1(%arg0: i32) -> (i32, i32) {
    %c0_i32 = arith.constant 0 : i32
    %c0_i32_0 = arith.constant 0 : i32
    %c0_i32_1 = arith.constant 0 : i32
    return %c0_i32, %c0_i32_0 : i32, i32
  }
  func.func @transform_2(%arg0: i32) -> (i32, i32) {
    %c0_i32 = arith.constant 0 : i32
    %c0_i32_0 = arith.constant 0 : i32
    %c0_i32_1 = arith.constant 0 : i32
    return %c0_i32, %c0_i32_0 : i32, i32
  }
  func.func @transform_3(%arg0: i32) -> (i32, i32) {
    %c0_i32 = arith.constant 0 : i32
    %c0_i32_0 = arith.constant 0 : i32
    %c0_i32_1 = arith.constant 0 : i32
    return %c0_i32, %c0_i32_0 : i32, i32
  }
  func.func @transform_4(%arg0: i32) -> (i32, i32) {
    %c0_i32 = arith.constant 0 : i32
    %c0_i32_0 = arith.constant 0 : i32
    return %c0_i32, %arg0 : i32, i32
  }
}

</mosaic_0001>

<llo_original>
// kernel: tpu_custom_call.1
$region0: #{tpu_custom_call.1}
  #allocation0 [shape = 'u32[]', space=smem, size = 0x4, offset = 0x4, fixed_abs, tag = 'smem constant byte address 0x4 - core index']
  #allocation1 [shape = 'u32[144,128]{1,0:T(1,128)}', space=vmem, size = 0x12000, scoped, tag = 'internal scratch']
  %s0 = inlined_call_operand.hbm [shape: bf16[4,1152], index: 0, kind: input, shape index: {}]
  %s1 = inlined_call_operand.vmem [shape: bf16[8,36], index: 1, kind: input, shape index: {}]
  %s2 = inlined_call_operand.vmem [shape: f32[8,1], index: 2, kind: input, shape index: {}]
  %s3 = inlined_call_operand.vmem [shape: f32[8,1], index: 3, kind: input, shape index: {}]
  %s4 = inlined_call_operand.hbm [shape: f32[8,1024], index: 4, kind: output, shape index: {}]
  %s5 = sld [smem:[#allocation0]]
  $region53: #{tpu_custom_call.1} parent=0
    _
  %s7 = ssub.s32 1, %s5
  %s8 = scalar_select 0, %s7, %s5
  $region1: #{tpu_custom_call.1} parent=0
    #allocation2 [shape = 'u8[9216]{0}', space=vmem, size = 0x2400, scoped, tag = 'input window, operand 0, single buffered']
    #allocation3 [shape = 's32[2]{0}', space=sflag, size = 0x8, scoped, tag = 'scoped memory for tpu_custom_call.1']
    #allocation4 [shape = 's32[2]{0}', space=sflag, size = 0x8, scoped, tag = 'scoped memory for tpu_custom_call.1']
    #allocation5 [shape = 'u8[32768]{0}', space=vmem, size = 0x8000, scoped, tag = 'output window, operand 0']
    %9 = vsyncpa [#allocation3], 0
    %10 = vsyncpa [#allocation4], 0
    %s11 = scalar_lea.sflag [#allocation4], 1
    %12 = vsyncpa %s11, 0
    loop: start=0, step=1, limit=4
    $region2: #{tpu_custom_call.1} parent=1 // loop_pre_header
      _
    $region3: #{tpu_custom_call.1} parent=1 // loop_header
      %s14 = sphi 0, %s18
      %p15 = scmp.ge.s32.totalorder %s14, 4
      %s22 = sphi 0, %s22
      %s24 = sphi 0, %s22
      %s25 = sphi 0, %s24
      %s39 = sphi 0, %s25
      %s43 = sphi 0, %s43
      %s45 = sphi 0, %s43
      %s46 = sphi 0, %s45
      %s60 = sphi 0, %s46
      %s64 = sphi 0, %s64
      %s66 = sphi 0, %s64
      %s67 = sphi 0, %s66
      %s81 = sphi 0, %s67
      %s85 = sphi 0, %s85
      %s87 = sphi 0, %s85
      %s88 = sphi 0, %s87
      %s102 = sphi 0, %s88
      %s108 = sphi 0, %s110
      %s111 = sphi 0, %s108
      %s112 = sphi 0, %s111
      %s128 = sphi 0, %s112
    $region4: #{tpu_custom_call.1} parent=1 // loop_header_branch
      %17 = sbr.rel (%p15) target = $region8
    $region5: #{tpu_custom_call.1} parent=1 // loop_body
      %s19 = ssub.s32 %s14, 1
      %s20 = ssub.s32 %s14, 2
      %s21 = sadd.s32 %s14, 1
      %s23 = sadd.s32 %s22, 1
      %p26 = scmp.eq.s32.totalorder %s14, 1
      %p27 = scmp.ne.s32.totalorder %s22, %s24
      %p28 = scmp.eq.s32.totalorder %s14, 0
      %p29 = por %p27, %p28
      %p30 = scmp.ne.s32.totalorder %s22, %s24
      %p31 = scmp.eq.s32.totalorder %s19, 1
      %p32 = por %p30, %p31
      %p33 = scmp.ne.s32.totalorder %s24, %s25
      %p34 = scmp.eq.s32.totalorder %s19, 0
      %p35 = por %p33, %p34
      %p36 = scmp.ne.s32.totalorder %s24, %s25
      %p37 = scmp.eq.s32.totalorder %s20, 1
      %p38 = por %p36, %p37
      %p40 = scmp.ne.s32.totalorder %s25, %s39
      %p41 = scmp.eq.s32.totalorder %s20, 0
      %p42 = por %p40, %p41
      %s44 = sadd.s32 %s43, 1
      %p47 = scmp.eq.s32.totalorder %s14, 1
      %p48 = scmp.ne.s32.totalorder %s43, %s45
      %p49 = scmp.eq.s32.totalorder %s14, 0
      %p50 = por %p48, %p49
      %p51 = scmp.ne.s32.totalorder %s43, %s45
      %p52 = scmp.eq.s32.totalorder %s19, 1
      %p53 = por %p51, %p52
      %p54 = scmp.ne.s32.totalorder %s45, %s46
      %p55 = scmp.eq.s32.totalorder %s19, 0
      %p56 = por %p54, %p55
      %p57 = scmp.ne.s32.totalorder %s45, %s46
      %p58 = scmp.eq.s32.totalorder %s20, 1
      %p59 = por %p57, %p58
      %p61 = scmp.ne.s32.totalorder %s46, %s60
      %p62 = scmp.eq.s32.totalorder %s20, 0
      %p63 = por %p61, %p62
      %s65 = sadd.s32 %s64, 1
      %p68 = scmp.eq.s32.totalorder %s14, 1
      %p69 = scmp.ne.s32.totalorder %s64, %s66
      %p70 = scmp.eq.s32.totalorder %s14, 0
      %p71 = por %p69, %p70
      %p72 = scmp.ne.s32.totalorder %s64, %s66
      %p73 = scmp.eq.s32.totalorder %s19, 1
      %p74 = por %p72, %p73
      %p75 = scmp.ne.s32.totalorder %s66, %s67
      %p76 = scmp.eq.s32.totalorder %s19, 0
      %p77 = por %p75, %p76
      %p78 = scmp.ne.s32.totalorder %s66, %s67
      %p79 = scmp.eq.s32.totalorder %s20, 1
      %p80 = por %p78, %p79
      %p82 = scmp.ne.s32.totalorder %s67, %s81
      %p83 = scmp.eq.s32.totalorder %s20, 0
      %p84 = por %p82, %p83
      %s86 = sadd.s32 %s85, 1
      %p89 = scmp.eq.s32.totalorder %s14, 1
      %p90 = scmp.ne.s32.totalorder %s85, %s87
      %p91 = scmp.eq.s32.totalorder %s14, 0
      %p92 = por %p90, %p91
      %p93 = scmp.ne.s32.totalorder %s85, %s87
      %p94 = scmp.eq.s32.totalorder %s19, 1
      %p95 = por %p93, %p94
      %p96 = scmp.ne.s32.totalorder %s87, %s88
      %p97 = scmp.eq.s32.totalorder %s19, 0
      %p98 = por %p96, %p97
      %p99 = scmp.ne.s32.totalorder %s87, %s88
      %p100 = scmp.eq.s32.totalorder %s20, 1
      %p101 = por %p99, %p100
      %p103 = scmp.ne.s32.totalorder %s88, %s102
      %p104 = scmp.eq.s32.totalorder %s20, 0
      %p105 = por %p103, %p104
      %s106 = ssub.s32 %s14, %s21
      %p107 = scmp.eq.s32.totalorder %s106, 0
      %s109 = sadd.s32 %s108, 1
      %s110 = scalar_select %p107, %s108, %s109
      %p113 = pneg %p107
      %p114 = scmp.eq.s32.totalorder %s14, 1
      %p115 = por %p113, %p114
      %p116 = scmp.ne.s32.totalorder %s108, %s111
      %p117 = scmp.eq.s32.totalorder %s14, 0
      %p118 = por %p116, %p117
      %p119 = scmp.ne.s32.totalorder %s108, %s111
      %p120 = scmp.eq.s32.totalorder %s19, 1
      %p121 = por %p119, %p120
      %p122 = scmp.ne.s32.totalorder %s111, %s112
      %p123 = scmp.eq.s32.totalorder %s19, 0
      %p124 = por %p122, %p123
      %p125 = scmp.ne.s32.totalorder %s111, %s112
      %p126 = scmp.eq.s32.totalorder %s20, 1
      %p127 = por %p125, %p126
      %p129 = scmp.ne.s32.totalorder %s112, %s128
      %p130 = scmp.eq.s32.totalorder %s20, 0
      %p131 = por %p129, %p130
      %p132 = scmp.le.s32.totalorder 1, %s14
      %p133 = scmp.lt.s32.totalorder %s14, 3
      %p134 = pnand %p132, %p133
      %p135 = pneg %p134
      // Predicated region
      $region9: #{tpu_custom_call.1} parent=5 // pred_check
        _
      $region10: #{tpu_custom_call.1} parent=5 // pred_check_branch
        %137 = sbr.rel (%p134) target = $region12
      $region11: #{tpu_custom_call.1} parent=5 // pred_region
        %s138 = ssub.s32 %s14, 1
        // Predicated region
        $region13: #{tpu_custom_call.1} parent=11 // pred_check
          %p139 = pneg %p35
        $region14: #{tpu_custom_call.1} parent=11 // pred_check_branch
          %141 = sbr.rel (%p139) target = $region16
        $region15: #{tpu_custom_call.1} parent=11 // pred_region
          %s143 = ssub.s32 288, 288
          %144 = vsyncadd [#allocation3], %s143
          %s146 = sshll.u32 [#allocation2], 4
          %s147 = int_to_ptr.vmem [resolvable:$true] %s146
          %149 = dma.hbm_to_vmem [thread:$0]  %s0, 288, %s147, [#allocation3]
        $region16: #{tpu_custom_call.1} parent=11 // pred_fallthru
          _
        // Predicated region
        $region17: #{tpu_custom_call.1} parent=11 // pred_check
          %p150 = pneg %p56
        $region18: #{tpu_custom_call.1} parent=11 // pred_check_branch
          %152 = sbr.rel (%p150) target = $region20
        $region19: #{tpu_custom_call.1} parent=11 // pred_region
          _
        $region20: #{tpu_custom_call.1} parent=11 // pred_fallthru
          _
        // Predicated region
        $region21: #{tpu_custom_call.1} parent=11 // pred_check
          %p153 = pneg %p77
        $region22: #{tpu_custom_call.1} parent=11 // pred_check_branch
          %155 = sbr.rel (%p153) target = $region24
        $region23: #{tpu_custom_call.1} parent=11 // pred_region
          _
        $region24: #{tpu_custom_call.1} parent=11 // pred_fallthru
          _
        // Predicated region
        $region25: #{tpu_custom_call.1} parent=11 // pred_check
          %p156 = pneg %p98
        $region26: #{tpu_custom_call.1} parent=11 // pred_check_branch
          %158 = sbr.rel (%p156) target = $region28
        $region27: #{tpu_custom_call.1} parent=11 // pred_region
          _
        $region28: #{tpu_custom_call.1} parent=11 // pred_fallthru
          _
      $region12: #{tpu_custom_call.1} parent=5 // pred_fallthru
        _
      %p159 = scmp.lt.s32.totalorder %s14, 2
      // Predicated region
      $region29: #{tpu_custom_call.1} parent=5 // pred_check
        %p160 = pneg %p159
      $region30: #{tpu_custom_call.1} parent=5 // pred_check_branch
        %162 = sbr.rel (%p160) target = $region32
      $region31: #{tpu_custom_call.1} parent=5 // pred_region
        _
      $region32: #{tpu_custom_call.1} parent=5 // pred_fallthru
        _
      %p163 = scmp.le.s32.totalorder 1, %s14
      %p164 = scmp.lt.s32.totalorder %s14, 3
      %p165 = pnand %p163, %p164
      %p166 = pneg %p165
      // Predicated region
      $region33: #{tpu_custom_call.1} parent=5 // pred_check
        _
      $region34: #{tpu_custom_call.1} parent=5 // pred_check_branch
        %168 = sbr.rel (%p165) target = $region36
      $region35: #{tpu_custom_call.1} parent=5 // pred_region
        %s169 = ssub.s32 %s14, 1
        // Predicated region
        $region37: #{tpu_custom_call.1} parent=35 // pred_check
          %p170 = pneg %p35
        $region38: #{tpu_custom_call.1} parent=35 // pred_check_branch
          %172 = sbr.rel (%p170) target = $region40
        $region39: #{tpu_custom_call.1} parent=35 // pred_region
          %173 = dma.done [#allocation3], 288
        $region40: #{tpu_custom_call.1} parent=35 // pred_fallthru
          _
        %p174 = pneg %p35
        %p175 = pneg %p32
        %p176 = pneg %p56
        %p177 = pneg %p53
        %p178 = pneg %p77
        %p179 = pneg %p74
        %p180 = pneg %p98
        %p181 = pneg %p95
        %p182 = pneg %p124
        %p183 = pneg %p121
        %s184 = sand.u32 %s111, 1
        %s185 = scalar_lea.sflag [#allocation4], %s184
        %s186 = sand.u32 %s111, 1
        %s187 = smul.addr %s186, 32
        %s188 = scalar_lea.vmem [#allocation5], %s187
        %s189 = smul.u32 4, %s19
        %s191 = smul.u32 %s19, 512
        %s192 = sshra.s32 %s191, 7
        %s193 = sand.u32 %s191, 127
        %s194 = smul.addr %s192, 2
        %s195 = scalar_lea.vmem [#allocation2], %s194
        %v196 = vld [vmem:[%s195] sm:$0xff]
        %v197 = vld [vmem:[%s195 + $0x8] sm:$0x3]
        %v198 = vld [vmem:[%s1] sm:$0xf]
        %v200 = vunpack.c.l.b16 %v198
        %v201 = vpack.c.b16 %v200, %v200
        %202 = vrot.lane.b32.xlu0 %v201, 124
        %v203 = vpop.permute.xlu0 %202
        %v206 = vcombine.high %v196, %v196
        %v208 = vunpack.c.l.s4 1983009808
        %v209 = vunpack.c.0.s8 %v208
        %v210 = vlaneseq
        %v211 = vshrl.u32 %v210, 7
        %v212 = vsub.s32 %v209, %v211
        %v213 = vrot.slane %v196, %v212
        %v215 = vunpack.c.l.s4 1983009808
        %v216 = vunpack.c.0.s8 %v215
        %v217 = vlaneseq
        %v218 = vshrl.u32 %v217, 7
        %v219 = vsub.s32 %v216, %v218
        %v220 = vrot.slane %v206, %v219
        %v221 = vcombine.high %v213, %v213
        %v222 = vcombine.high %v220, %v220
        %v224 = vunpack.c.l.s4 1983009808
        %v225 = vunpack.c.0.s8 %v224
        %v226 = vlaneseq
        %v227 = vshrl.u32 %v226, 7
        %v228 = vsub.s32 %v225, %v227
        %v229 = vrot.slane %v197, %v228
        %230 = vrot.lane.b32.xlu0 %v213, 127
        %v231 = vpop.permute.xlu0 %230
        %232 = vrot.lane.b32.xlu0 %v221, 127
        %v233 = vpop.permute.xlu0 %232
        %234 = vrot.lane.b32.xlu0 %v220, 127
        %v235 = vpop.permute.xlu0 %234
        %236 = vrot.lane.b32.xlu0 %v222, 127
        %v237 = vpop.permute.xlu0 %236
        %238 = vrot.lane.b32.xlu0 %v229, 127
        %v239 = vpop.permute.xlu0 %238
        %vm240 = vcmask 1039360
        %v241 = vsel %vm240, %v231, %v233
        %v242 = vsel %vm240, %v233, %v235
        %v243 = vsel %vm240, %v235, %v237
        %v244 = vsel %vm240, %v237, %v239
        %vm245 = vcmask 31744
        %v247 = vsel %vm245, %v203, 0
        %vm249 = vcmask 1041408
        %v251 = vsel %vm249, %v241, 0
        %v254 = vsel %vm249, %v242, 0
        %v257 = vsel %vm249, %v243, 0
        %v260 = vsel %vm249, %v244, 0
        %262 = vmatprep.subr.bf16.mxu0 %v254
        %263 = vmatpush1.bf16.msra.mxu0 %v251
        %264 = vmatprep.subr.bf16.mxu0 0
        %265 = vmatpush1.bf16.msra.mxu0 0
        %266 = vmatprep.subr.bf16.mxu0 0
        %267 = vmatpush1.bf16.msra.mxu0 0
        %268 = vmatprep.subr.bf16.mxu0 0
        %269 = vmatpush1.bf16.msra.mxu0 0
        %270 = vmatprep.subr.bf16.mxu0 0
        %271 = vmatpush1.bf16.msra.mxu0 0
        %272 = vmatprep.subr.bf16.mxu0 0
        %273 = vmatpush1.bf16.msra.mxu0 0
        %274 = vmatprep.subr.bf16.mxu0 0
        %275 = vmatpush1.bf16.msra.mxu0 0
        %276 = vmatprep.subr.bf16.mxu0 0
        %277 = vmatpush1.bf16.msra.mxu0 0
        %278 = vmatprep.subr.bf16.mxu0 0
        %279 = vmatpush1.bf16.msra.mxu0 0
        %280 = vmatprep.subr.bf16.mxu0 0
        %281 = vmatpush1.bf16.msra.mxu0 0
        %282 = vmatprep.subr.bf16.mxu0 0
        %283 = vmatpush1.bf16.msra.mxu0 0
        %284 = vmatprep.subr.bf16.mxu0 0
        %285 = vmatpush1.bf16.msra.mxu0 0
        %286 = vmatprep.subr.bf16.mxu0 0
        %287 = vmatpush1.bf16.msra.mxu0 0
        %288 = vmatprep.subr.bf16.mxu0 0
        %289 = vmatpush1.bf16.msra.mxu0 0
        %290 = vmatprep.subr.bf16.mxu0 0
        %291 = vmatpush1.bf16.msra.mxu0 0
        %292 = vmatprep.subr.bf16.mxu0 0
        %293 = vmatpush1.bf16.msra.mxu0 0
        %294 = vmatprep.mubr.bf16.mxu0 0
        %295 = vmatmul.mubr.bf16.gmra.mrb[0].mxu0 %v247
        %v296 = vpop.f32.mrb[0].mxu0
        %v297 = vadd.f32 0.0, %v296
        %v298 = vpop.f32.mrb[0].mxu0
        %v299 = vadd.f32 0.0, %v298
        %v300 = vpop.f32.mrb[0].mxu0
        %v301 = vpop.f32.mrb[0].mxu0
        %302 = vdwg.mxu0
        %303 = vmatprep.subr.bf16.mxu0 %v260
        %304 = vmatpush1.bf16.msra.mxu0 %v257
        %305 = vmatprep.subr.bf16.mxu0 0
        %306 = vmatpush1.bf16.msra.mxu0 0
        %307 = vmatprep.subr.bf16.mxu0 0
        %308 = vmatpush1.bf16.msra.mxu0 0
        %309 = vmatprep.subr.bf16.mxu0 0
        %310 = vmatpush1.bf16.msra.mxu0 0
        %311 = vmatprep.subr.bf16.mxu0 0
        %312 = vmatpush1.bf16.msra.mxu0 0
        %313 = vmatprep.subr.bf16.mxu0 0
        %314 = vmatpush1.bf16.msra.mxu0 0
        %315 = vmatprep.subr.bf16.mxu0 0
        %316 = vmatpush1.bf16.msra.mxu0 0
        %317 = vmatprep.subr.bf16.mxu0 0
        %318 = vmatpush1.bf16.msra.mxu0 0
        %319 = vmatprep.subr.bf16.mxu0 0
        %320 = vmatpush1.bf16.msra.mxu0 0
        %321 = vmatprep.subr.bf16.mxu0 0
        %322 = vmatpush1.bf16.msra.mxu0 0
        %323 = vmatprep.subr.bf16.mxu0 0
        %324 = vmatpush1.bf16.msra.mxu0 0
        %325 = vmatprep.subr.bf16.mxu0 0
        %326 = vmatpush1.bf16.msra.mxu0 0
        %327 = vmatprep.subr.bf16.mxu0 0
        %328 = vmatpush1.bf16.msra.mxu0 0
        %329 = vmatprep.subr.bf16.mxu0 0
        %330 = vmatpush1.bf16.msra.mxu0 0
        %331 = vmatprep.subr.bf16.mxu0 0
        %332 = vmatpush1.bf16.msra.mxu0 0
        %333 = vmatprep.subr.bf16.mxu0 0
        %334 = vmatpush1.bf16.msra.mxu0 0
        %335 = vmatprep.mubr.bf16.mxu0 0
        %336 = vmatmul.mubr.bf16.gmra.mrb[0].mxu0 %v247
        %v337 = vpop.f32.mrb[0].mxu0
        %v338 = vadd.f32 0.0, %v337
        %v339 = vpop.f32.mrb[0].mxu0
        %v340 = vadd.f32 0.0, %v339
        %v341 = vpop.f32.mrb[0].mxu0
        %v342 = vpop.f32.mrb[0].mxu0
        %343 = vdwg.mxu0
        %v345 = vsel %vm245, %v198, 0
        %v348 = vsel %vm249, %v213, 0
        %v351 = vsel %vm249, %v221, 0
        %v354 = vsel %vm249, %v220, 0
        %v357 = vsel %vm249, %v222, 0
        %359 = vmatprep.subr.bf16.mxu0 %v351
        %360 = vmatpush1.bf16.msra.mxu0 %v348
        %361 = vmatprep.subr.bf16.mxu0 0
        %362 = vmatpush1.bf16.msra.mxu0 0
        %363 = vmatprep.subr.bf16.mxu0 0
        %364 = vmatpush1.bf16.msra.mxu0 0
        %365 = vmatprep.subr.bf16.mxu0 0
        %366 = vmatpush1.bf16.msra.mxu0 0
        %367 = vmatprep.subr.bf16.mxu0 0
        %368 = vmatpush1.bf16.msra.mxu0 0
        %369 = vmatprep.subr.bf16.mxu0 0
        %370 = vmatpush1.bf16.msra.mxu0 0
        %371 = vmatprep.subr.bf16.mxu0 0
        %372 = vmatpush1.bf16.msra.mxu0 0
        %373 = vmatprep.subr.bf16.mxu0 0
        %374 = vmatpush1.bf16.msra.mxu0 0
        %375 = vmatprep.subr.bf16.mxu0 0
        %376 = vmatpush1.bf16.msra.mxu0 0
        %377 = vmatprep.subr.bf16.mxu0 0
        %378 = vmatpush1.bf16.msra.mxu0 0
        %379 = vmatprep.subr.bf16.mxu0 0
        %380 = vmatpush1.bf16.msra.mxu0 0
        %381 = vmatprep.subr.bf16.mxu0 0
        %382 = vmatpush1.bf16.msra.mxu0 0
        %383 = vmatprep.subr.bf16.mxu0 0
        %384 = vmatpush1.bf16.msra.mxu0 0
        %385 = vmatprep.subr.bf16.mxu0 0
        %386 = vmatpush1.bf16.msra.mxu0 0
        %387 = vmatprep.subr.bf16.mxu0 0
        %388 = vmatpush1.bf16.msra.mxu0 0
        %389 = vmatprep.subr.bf16.mxu0 0
        %390 = vmatpush1.bf16.msra.mxu0 0
        %391 = vmatprep.mubr.bf16.mxu0 0
        %392 = vmatmul.mubr.bf16.gmra.mrb[0].mxu0 %v345
        %v393 = vpop.f32.mrb[0].mxu0
        %v394 = vadd.f32 %v297, %v393
        %v395 = vpop.f32.mrb[0].mxu0
        %v396 = vadd.f32 %v299, %v395
        %v397 = vpop.f32.mrb[0].mxu0
        %v398 = vpop.f32.mrb[0].mxu0
        %399 = vdwg.mxu0
        %400 = vmatprep.subr.bf16.mxu0 %v357
        %401 = vmatpush1.bf16.msra.mxu0 %v354
        %402 = vmatprep.subr.bf16.mxu0 0
        %403 = vmatpush1.bf16.msra.mxu0 0
        %404 = vmatprep.subr.bf16.mxu0 0
        %405 = vmatpush1.bf16.msra.mxu0 0
        %406 = vmatprep.subr.bf16.mxu0 0
        %407 = vmatpush1.bf16.msra.mxu0 0
        %408 = vmatprep.subr.bf16.mxu0 0
        %409 = vmatpush1.bf16.msra.mxu0 0
        %410 = vmatprep.subr.bf16.mxu0 0
        %411 = vmatpush1.bf16.msra.mxu0 0
        %412 = vmatprep.subr.bf16.mxu0 0
        %413 = vmatpush1.bf16.msra.mxu0 0
        %414 = vmatprep.subr.bf16.mxu0 0
        %415 = vmatpush1.bf16.msra.mxu0 0
        %416 = vmatprep.subr.bf16.mxu0 0
        %417 = vmatpush1.bf16.msra.mxu0 0
        %418 = vmatprep.subr.bf16.mxu0 0
        %419 = vmatpush1.bf16.msra.mxu0 0
        %420 = vmatprep.subr.bf16.mxu0 0
        %421 = vmatpush1.bf16.msra.mxu0 0
        %422 = vmatprep.subr.bf16.mxu0 0
        %423 = vmatpush1.bf16.msra.mxu0 0
        %424 = vmatprep.subr.bf16.mxu0 0
        %425 = vmatpush1.bf16.msra.mxu0 0
        %426 = vmatprep.subr.bf16.mxu0 0
        %427 = vmatpush1.bf16.msra.mxu0 0
        %428 = vmatprep.subr.bf16.mxu0 0
        %429 = vmatpush1.bf16.msra.mxu0 0
        %430 = vmatprep.subr.bf16.mxu0 0
        %431 = vmatpush1.bf16.msra.mxu0 0
        %432 = vmatprep.mubr.bf16.mxu0 0
        %433 = vmatmul.mubr.bf16.gmra.mrb[0].mxu0 %v345
        %v434 = vpop.f32.mrb[0].mxu0
        %v435 = vadd.f32 %v338, %v434
        %v436 = vpop.f32.mrb[0].mxu0
        %v437 = vadd.f32 %v340, %v436
        %v438 = vpop.f32.mrb[0].mxu0
        %v439 = vpop.f32.mrb[0].mxu0
        %440 = vdwg.mxu0
        %441 = vrot.lane.b32.xlu0 %v201, 120
        %v442 = vpop.permute.xlu0 %441
        %443 = vrot.lane.b32.xlu0 %v213, 126
        %v444 = vpop.permute.xlu0 %443
        %445 = vrot.lane.b32.xlu0 %v221, 126
        %v446 = vpop.permute.xlu0 %445
        %447 = vrot.lane.b32.xlu0 %v220, 126
        %v448 = vpop.permute.xlu0 %447
        %449 = vrot.lane.b32.xlu0 %v222, 126
        %v450 = vpop.permute.xlu0 %449
        %451 = vrot.lane.b32.xlu0 %v229, 126
        %v452 = vpop.permute.xlu0 %451
        %vm453 = vcmask 1031168
        %v454 = vsel %vm453, %v444, %v446
        %v455 = vsel %vm453, %v446, %v448
        %v456 = vsel %vm453, %v448, %v450
        %v457 = vsel %vm453, %v450, %v452
        %v459 = vsel %vm245, %v442, 0
        %v462 = vsel %vm249, %v454, 0
        %v465 = vsel %vm249, %v455, 0
        %v468 = vsel %vm249, %v456, 0
        %v471 = vsel %vm249, %v457, 0
        %473 = vmatprep.subr.bf16.mxu0 %v465
        %474 = vmatpush1.bf16.msra.mxu0 %v462
        %475 = vmatprep.subr.bf16.mxu0 0
        %476 = vmatpush1.bf16.msra.mxu0 0
        %477 = vmatprep.subr.bf16.mxu0 0
        %478 = vmatpush1.bf16.msra.mxu0 0
        %479 = vmatprep.subr.bf16.mxu0 0
        %480 = vmatpush1.bf16.msra.mxu0 0
        %481 = vmatprep.subr.bf16.mxu0 0
        %482 = vmatpush1.bf16.msra.mxu0 0
        %483 = vmatprep.subr.bf16.mxu0 0
        %484 = vmatpush1.bf16.msra.mxu0 0
        %485 = vmatprep.subr.bf16.mxu0 0
        %486 = vmatpush1.bf16.msra.mxu0 0
        %487 = vmatprep.subr.bf16.mxu0 0
        %488 = vmatpush1.bf16.msra.mxu0 0
        %489 = vmatprep.subr.bf16.mxu0 0
        %490 = vmatpush1.bf16.msra.mxu0 0
        %491 = vmatprep.subr.bf16.mxu0 0
        %492 = vmatpush1.bf16.msra.mxu0 0
        %493 = vmatprep.subr.bf16.mxu0 0
        %494 = vmatpush1.bf16.msra.mxu0 0
        %495 = vmatprep.subr.bf16.mxu0 0
        %496 = vmatpush1.bf16.msra.mxu0 0
        %497 = vmatprep.subr.bf16.mxu0 0
        %498 = vmatpush1.bf16.msra.mxu0 0
        %499 = vmatprep.subr.bf16.mxu0 0
        %500 = vmatpush1.bf16.msra.mxu0 0
        %501 = vmatprep.subr.bf16.mxu0 0
        %502 = vmatpush1.bf16.msra.mxu0 0
        %503 = vmatprep.subr.bf16.mxu0 0
        %504 = vmatpush1.bf16.msra.mxu0 0
        %505 = vmatprep.mubr.bf16.mxu0 0
        %506 = vmatmul.mubr.bf16.gmra.mrb[0].mxu0 %v459
        %v507 = vpop.f32.mrb[0].mxu0
        %v508 = vadd.f32 0.0, %v507
        %v509 = vpop.f32.mrb[0].mxu0
        %v510 = vadd.f32 0.0, %v509
        %v511 = vpop.f32.mrb[0].mxu0
        %v512 = vpop.f32.mrb[0].mxu0
        %513 = vdwg.mxu0
        %514 = vmatprep.subr.bf16.mxu0 %v471
        %515 = vmatpush1.bf16.msra.mxu0 %v468
        %516 = vmatprep.subr.bf16.mxu0 0
        %517 = vmatpush1.bf16.msra.mxu0 0
        %518 = vmatprep.subr.bf16.mxu0 0
        %519 = vmatpush1.bf16.msra.mxu0 0
        %520 = vmatprep.subr.bf16.mxu0 0
        %521 = vmatpush1.bf16.msra.mxu0 0
        %522 = vmatprep.subr.bf16.mxu0 0
        %523 = vmatpush1.bf16.msra.mxu0 0
        %524 = vmatprep.subr.bf16.mxu0 0
        %525 = vmatpush1.bf16.msra.mxu0 0
        %526 = vmatprep.subr.bf16.mxu0 0
        %527 = vmatpush1.bf16.msra.mxu0 0
        %528 = vmatprep.subr.bf16.mxu0 0
        %529 = vmatpush1.bf16.msra.mxu0 0
        %530 = vmatprep.subr.bf16.mxu0 0
        %531 = vmatpush1.bf16.msra.mxu0 0
        %532 = vmatprep.subr.bf16.mxu0 0
        %533 = vmatpush1.bf16.msra.mxu0 0
        %534 = vmatprep.subr.bf16.mxu0 0
        %535 = vmatpush1.bf16.msra.mxu0 0
        %536 = vmatprep.subr.bf16.mxu0 0
        %537 = vmatpush1.bf16.msra.mxu0 0
        %538 = vmatprep.subr.bf16.mxu0 0
        %539 = vmatpush1.bf16.msra.mxu0 0
        %540 = vmatprep.subr.bf16.mxu0 0
        %541 = vmatpush1.bf16.msra.mxu0 0
        %542 = vmatprep.subr.bf16.mxu0 0
        %543 = vmatpush1.bf16.msra.mxu0 0
        %544 = vmatprep.subr.bf16.mxu0 0
        %545 = vmatpush1.bf16.msra.mxu0 0
        %546 = vmatprep.mubr.bf16.mxu0 0
        %547 = vmatmul.mubr.bf16.gmra.mrb[0].mxu0 %v459
        %v548 = vpop.f32.mrb[0].mxu0
        %v549 = vadd.f32 0.0, %v548
        %v550 = vpop.f32.mrb[0].mxu0
        %v551 = vadd.f32 0.0, %v550
        %v552 = vpop.f32.mrb[0].mxu0
        %v553 = vpop.f32.mrb[0].mxu0
        %554 = vdwg.mxu0
        %v555 = vadd.f32 %v394, %v508
        %v556 = vadd.f32 %v396, %v510
        %v557 = vadd.f32 %v435, %v549
        %v558 = vadd.f32 %v437, %v551
        %559 = vrot.lane.b32.xlu0 %v201, 116
        %v560 = vpop.permute.xlu0 %559
        %561 = vrot.lane.b32.xlu0 %v213, 110
        %v562 = vpop.permute.xlu0 %561
        %563 = vrot.lane.b32.xlu0 %v221, 110
        %v564 = vpop.permute.xlu0 %563
        %565 = vrot.lane.b32.xlu0 %v220, 110
        %v566 = vpop.permute.xlu0 %565
        %567 = vrot.lane.b32.xlu0 %v222, 110
        %v568 = vpop.permute.xlu0 %567
        %569 = vrot.lane.b32.xlu0 %v229, 110
        %v570 = vpop.permute.xlu0 %569
        %vm571 = vcmask 900096
        %v572 = vsel %vm571, %v562, %v564
        %v573 = vsel %vm571, %v564, %v566
        %v574 = vsel %vm571, %v566, %v568
        %v575 = vsel %vm571, %v568, %v570
        %v577 = vsel %vm245, %v560, 0
        %v580 = vsel %vm249, %v572, 0
        %v583 = vsel %vm249, %v573, 0
        %v586 = vsel %vm249, %v574, 0
        %v589 = vsel %vm249, %v575, 0
        %591 = vmatprep.subr.bf16.mxu0 %v583
        %592 = vmatpush1.bf16.msra.mxu0 %v580
        %593 = vmatprep.subr.bf16.mxu0 0
        %594 = vmatpush1.bf16.msra.mxu0 0
        %595 = vmatprep.subr.bf16.mxu0 0
        %596 = vmatpush1.bf16.msra.mxu0 0
        %597 = vmatprep.subr.bf16.mxu0 0
        %598 = vmatpush1.bf16.msra.mxu0 0
        %599 = vmatprep.subr.bf16.mxu0 0
        %600 = vmatpush1.bf16.msra.mxu0 0
        %601 = vmatprep.subr.bf16.mxu0 0
        %602 = vmatpush1.bf16.msra.mxu0 0
        %603 = vmatprep.subr.bf16.mxu0 0
        %604 = vmatpush1.bf16.msra.mxu0 0
        %605 = vmatprep.subr.bf16.mxu0 0
        %606 = vmatpush1.bf16.msra.mxu0 0
        %607 = vmatprep.subr.bf16.mxu0 0
        %608 = vmatpush1.bf16.msra.mxu0 0
        %609 = vmatprep.subr.bf16.mxu0 0
        %610 = vmatpush1.bf16.msra.mxu0 0
        %611 = vmatprep.subr.bf16.mxu0 0
        %612 = vmatpush1.bf16.msra.mxu0 0
        %613 = vmatprep.subr.bf16.mxu0 0
        %614 = vmatpush1.bf16.msra.mxu0 0
        %615 = vmatprep.subr.bf16.mxu0 0
        %616 = vmatpush1.bf16.msra.mxu0 0
        %617 = vmatprep.subr.bf16.mxu0 0
        %618 = vmatpush1.bf16.msra.mxu0 0
        %619 = vmatprep.subr.bf16.mxu0 0
        %620 = vmatpush1.bf16.msra.mxu0 0
        %621 = vmatprep.subr.bf16.mxu0 0
        %622 = vmatpush1.bf16.msra.mxu0 0
        %623 = vmatprep.mubr.bf16.mxu0 0
        %624 = vmatmul.mubr.bf16.gmra.mrb[0].mxu0 %v577
        %v625 = vpop.f32.mrb[0].mxu0
        %v626 = vadd.f32 0.0, %v625
        %v627 = vpop.f32.mrb[0].mxu0
        %v628 = vadd.f32 0.0, %v627
        %v629 = vpop.f32.mrb[0].mxu0
        %v630 = vpop.f32.mrb[0].mxu0
        %631 = vdwg.mxu0
        %632 = vmatprep.subr.bf16.mxu0 %v589
        %633 = vmatpush1.bf16.msra.mxu0 %v586
        %634 = vmatprep.subr.bf16.mxu0 0
        %635 = vmatpush1.bf16.msra.mxu0 0
        %636 = vmatprep.subr.bf16.mxu0 0
        %637 = vmatpush1.bf16.msra.mxu0 0
        %638 = vmatprep.subr.bf16.mxu0 0
        %639 = vmatpush1.bf16.msra.mxu0 0
        %640 = vmatprep.subr.bf16.mxu0 0
        %641 = vmatpush1.bf16.msra.mxu0 0
        %642 = vmatprep.subr.bf16.mxu0 0
        %643 = vmatpush1.bf16.msra.mxu0 0
        %644 = vmatprep.subr.bf16.mxu0 0
        %645 = vmatpush1.bf16.msra.mxu0 0
        %646 = vmatprep.subr.bf16.mxu0 0
        %647 = vmatpush1.bf16.msra.mxu0 0
        %648 = vmatprep.subr.bf16.mxu0 0
        %649 = vmatpush1.bf16.msra.mxu0 0
        %650 = vmatprep.subr.bf16.mxu0 0
        %651 = vmatpush1.bf16.msra.mxu0 0
        %652 = vmatprep.subr.bf16.mxu0 0
        %653 = vmatpush1.bf16.msra.mxu0 0
        %654 = vmatprep.subr.bf16.mxu0 0
        %655 = vmatpush1.bf16.msra.mxu0 0
        %656 = vmatprep.subr.bf16.mxu0 0
        %657 = vmatpush1.bf16.msra.mxu0 0
        %658 = vmatprep.subr.bf16.mxu0 0
        %659 = vmatpush1.bf16.msra.mxu0 0
        %660 = vmatprep.subr.bf16.mxu0 0
        %661 = vmatpush1.bf16.msra.mxu0 0
        %662 = vmatprep.subr.bf16.mxu0 0
        %663 = vmatpush1.bf16.msra.mxu0 0
        %664 = vmatprep.mubr.bf16.mxu0 0
        %665 = vmatmul.mubr.bf16.gmra.mrb[0].mxu0 %v577
        %v666 = vpop.f32.mrb[0].mxu0
        %v667 = vadd.f32 0.0, %v666
        %v668 = vpop.f32.mrb[0].mxu0
        %v669 = vadd.f32 0.0, %v668
        %v670 = vpop.f32.mrb[0].mxu0
        %v671 = vpop.f32.mrb[0].mxu0
        %672 = vdwg.mxu0
        %v673 = vadd.f32 %v555, %v626
        %v674 = vadd.f32 %v556, %v628
        %v675 = vadd.f32 %v557, %v667
        %v676 = vadd.f32 %v558, %v669
        %677 = vrot.lane.b32.xlu0 %v201, 112
        %v678 = vpop.permute.xlu0 %677
        %679 = vrot.lane.b32.xlu0 %v213, 109
        %v680 = vpop.permute.xlu0 %679
        %681 = vrot.lane.b32.xlu0 %v221, 109
        %v682 = vpop.permute.xlu0 %681
        %683 = vrot.lane.b32.xlu0 %v220, 109
        %v684 = vpop.permute.xlu0 %683
        %685 = vrot.lane.b32.xlu0 %v222, 109
        %v686 = vpop.permute.xlu0 %685
        %687 = vrot.lane.b32.xlu0 %v229, 109
        %v688 = vpop.permute.xlu0 %687
        %vm689 = vcmask 891904
        %v690 = vsel %vm689, %v680, %v682
        %v691 = vsel %vm689, %v682, %v684
        %v692 = vsel %vm689, %v684, %v686
        %v693 = vsel %vm689, %v686, %v688
        %v695 = vsel %vm245, %v678, 0
        %v698 = vsel %vm249, %v690, 0
        %v701 = vsel %vm249, %v691, 0
        %v704 = vsel %vm249, %v692, 0
        %v707 = vsel %vm249, %v693, 0
        %709 = vmatprep.subr.bf16.mxu0 %v701
        %710 = vmatpush1.bf16.msra.mxu0 %v698
        %711 = vmatprep.subr.bf16.mxu0 0
        %712 = vmatpush1.bf16.msra.mxu0 0
        %713 = vmatprep.subr.bf16.mxu0 0
        %714 = vmatpush1.bf16.msra.mxu0 0
        %715 = vmatprep.subr.bf16.mxu0 0
        %716 = vmatpush1.bf16.msra.mxu0 0
        %717 = vmatprep.subr.bf16.mxu0 0
        %718 = vmatpush1.bf16.msra.mxu0 0
        %719 = vmatprep.subr.bf16.mxu0 0
        %720 = vmatpush1.bf16.msra.mxu0 0
        %721 = vmatprep.subr.bf16.mxu0 0
        %722 = vmatpush1.bf16.msra.mxu0 0
        %723 = vmatprep.subr.bf16.mxu0 0
        %724 = vmatpush1.bf16.msra.mxu0 0
        %725 = vmatprep.subr.bf16.mxu0 0
        %726 = vmatpush1.bf16.msra.mxu0 0
        %727 = vmatprep.subr.bf16.mxu0 0
        %728 = vmatpush1.bf16.msra.mxu0 0
        %729 = vmatprep.subr.bf16.mxu0 0
        %730 = vmatpush1.bf16.msra.mxu0 0
        %731 = vmatprep.subr.bf16.mxu0 0
        %732 = vmatpush1.bf16.msra.mxu0 0
        %733 = vmatprep.subr.bf16.mxu0 0
        %734 = vmatpush1.bf16.msra.mxu0 0
        %735 = vmatprep.subr.bf16.mxu0 0
        %736 = vmatpush1.bf16.msra.mxu0 0
        %737 = vmatprep.subr.bf16.mxu0 0
        %738 = vmatpush1.bf16.msra.mxu0 0
        %739 = vmatprep.subr.bf16.mxu0 0
        %740 = vmatpush1.bf16.msra.mxu0 0
        %741 = vmatprep.mubr.bf16.mxu0 0
        %742 = vmatmul.mubr.bf16.gmra.mrb[0].mxu0 %v695
        %v743 = vpop.f32.mrb[0].mxu0
        %v744 = vadd.f32 0.0, %v743
        %v745 = vpop.f32.mrb[0].mxu0
        %v746 = vadd.f32 0.0, %v745
        %v747 = vpop.f32.mrb[0].mxu0
        %v748 = vpop.f32.mrb[0].mxu0
        %749 = vdwg.mxu0
        %750 = vmatprep.subr.bf16.mxu0 %v707
        %751 = vmatpush1.bf16.msra.mxu0 %v704
        %752 = vmatprep.subr.bf16.mxu0 0
        %753 = vmatpush1.bf16.msra.mxu0 0
        %754 = vmatprep.subr.bf16.mxu0 0
        %755 = vmatpush1.bf16.msra.mxu0 0
        %756 = vmatprep.subr.bf16.mxu0 0
        %757 = vmatpush1.bf16.msra.mxu0 0
        %758 = vmatprep.subr.bf16.mxu0 0
        %759 = vmatpush1.bf16.msra.mxu0 0
        %760 = vmatprep.subr.bf16.mxu0 0
        %761 = vmatpush1.bf16.msra.mxu0 0
        %762 = vmatprep.subr.bf16.mxu0 0
        %763 = vmatpush1.bf16.msra.mxu0 0
        %764 = vmatprep.subr.bf16.mxu0 0
        %765 = vmatpush1.bf16.msra.mxu0 0
        %766 = vmatprep.subr.bf16.mxu0 0
        %767 = vmatpush1.bf16.msra.mxu0 0
        %768 = vmatprep.subr.bf16.mxu0 0
        %769 = vmatpush1.bf16.msra.mxu0 0
        %770 = vmatprep.subr.bf16.mxu0 0
        %771 = vmatpush1.bf16.msra.mxu0 0
        %772 = vmatprep.subr.bf16.mxu0 0
        %773 = vmatpush1.bf16.msra.mxu0 0
        %774 = vmatprep.subr.bf16.mxu0 0
        %775 = vmatpush1.bf16.msra.mxu0 0
        %776 = vmatprep.subr.bf16.mxu0 0
        %777 = vmatpush1.bf16.msra.mxu0 0
        %778 = vmatprep.subr.bf16.mxu0 0
        %779 = vmatpush1.bf16.msra.mxu0 0
        %780 = vmatprep.subr.bf16.mxu0 0
        %781 = vmatpush1.bf16.msra.mxu0 0
        %782 = vmatprep.mubr.bf16.mxu0 0
        %783 = vmatmul.mubr.bf16.gmra.mrb[0].mxu0 %v695
        %v784 = vpop.f32.mrb[0].mxu0
        %v785 = vadd.f32 0.0, %v784
        %v786 = vpop.f32.mrb[0].mxu0
        %v787 = vadd.f32 0.0, %v786
        %v788 = vpop.f32.mrb[0].mxu0
        %v789 = vpop.f32.mrb[0].mxu0
        %790 = vdwg.mxu0
        %v791 = vadd.f32 %v673, %v744
        %v792 = vadd.f32 %v674, %v746
        %v793 = vadd.f32 %v675, %v785
        %v794 = vadd.f32 %v676, %v787
        %795 = vrot.lane.b32.xlu0 %v201, 108
        %v796 = vpop.permute.xlu0 %795
        %797 = vrot.lane.b32.xlu0 %v213, 108
        %v798 = vpop.permute.xlu0 %797
        %799 = vrot.lane.b32.xlu0 %v221, 108
        %v800 = vpop.permute.xlu0 %799
        %801 = vrot.lane.b32.xlu0 %v220, 108
        %v802 = vpop.permute.xlu0 %801
        %803 = vrot.lane.b32.xlu0 %v222, 108
        %v804 = vpop.permute.xlu0 %803
        %805 = vrot.lane.b32.xlu0 %v229, 108
        %v806 = vpop.permute.xlu0 %805
        %vm807 = vcmask 883712
        %v808 = vsel %vm807, %v798, %v800
        %v809 = vsel %vm807, %v800, %v802
        %v810 = vsel %vm807, %v802, %v804
        %v811 = vsel %vm807, %v804, %v806
        %v813 = vsel %vm245, %v796, 0
        %v816 = vsel %vm249, %v808, 0
        %v819 = vsel %vm249, %v809, 0
        %v822 = vsel %vm249, %v810, 0
        %v825 = vsel %vm249, %v811, 0
        %827 = vmatprep.subr.bf16.mxu0 %v819
        %828 = vmatpush1.bf16.msra.mxu0 %v816
        %829 = vmatprep.subr.bf16.mxu0 0
        %830 = vmatpush1.bf16.msra.mxu0 0
        %831 = vmatprep.subr.bf16.mxu0 0
        %832 = vmatpush1.bf16.msra.mxu0 0
        %833 = vmatprep.subr.bf16.mxu0 0
        %834 = vmatpush1.bf16.msra.mxu0 0
        %835 = vmatprep.subr.bf16.mxu0 0
        %836 = vmatpush1.bf16.msra.mxu0 0
        %837 = vmatprep.subr.bf16.mxu0 0
        %838 = vmatpush1.bf16.msra.mxu0 0
        %839 = vmatprep.subr.bf16.mxu0 0
        %840 = vmatpush1.bf16.msra.mxu0 0
        %841 = vmatprep.subr.bf16.mxu0 0
        %842 = vmatpush1.bf16.msra.mxu0 0
        %843 = vmatprep.subr.bf16.mxu0 0
        %844 = vmatpush1.bf16.msra.mxu0 0
        %845 = vmatprep.subr.bf16.mxu0 0
        %846 = vmatpush1.bf16.msra.mxu0 0
        %847 = vmatprep.subr.bf16.mxu0 0
        %848 = vmatpush1.bf16.msra.mxu0 0
        %849 = vmatprep.subr.bf16.mxu0 0
        %850 = vmatpush1.bf16.msra.mxu0 0
        %851 = vmatprep.subr.bf16.mxu0 0
        %852 = vmatpush1.bf16.msra.mxu0 0
        %853 = vmatprep.subr.bf16.mxu0 0
        %854 = vmatpush1.bf16.msra.mxu0 0
        %855 = vmatprep.subr.bf16.mxu0 0
        %856 = vmatpush1.bf16.msra.mxu0 0
        %857 = vmatprep.subr.bf16.mxu0 0
        %858 = vmatpush1.bf16.msra.mxu0 0
        %859 = vmatprep.mubr.bf16.mxu0 0
        %860 = vmatmul.mubr.bf16.gmra.mrb[0].mxu0 %v813
        %v861 = vpop.f32.mrb[0].mxu0
        %v862 = vadd.f32 0.0, %v861
        %v863 = vpop.f32.mrb[0].mxu0
        %v864 = vadd.f32 0.0, %v863
        %v865 = vpop.f32.mrb[0].mxu0
        %v866 = vpop.f32.mrb[0].mxu0
        %867 = vdwg.mxu0
        %868 = vmatprep.subr.bf16.mxu0 %v825
        %869 = vmatpush1.bf16.msra.mxu0 %v822
        %870 = vmatprep.subr.bf16.mxu0 0
        %871 = vmatpush1.bf16.msra.mxu0 0
        %872 = vmatprep.subr.bf16.mxu0 0
        %873 = vmatpush1.bf16.msra.mxu0 0
        %874 = vmatprep.subr.bf16.mxu0 0
        %875 = vmatpush1.bf16.msra.mxu0 0
        %876 = vmatprep.subr.bf16.mxu0 0
        %877 = vmatpush1.bf16.msra.mxu0 0
        %878 = vmatprep.subr.bf16.mxu0 0
        %879 = vmatpush1.bf16.msra.mxu0 0
        %880 = vmatprep.subr.bf16.mxu0 0
        %881 = vmatpush1.bf16.msra.mxu0 0
        %882 = vmatprep.subr.bf16.mxu0 0
        %883 = vmatpush1.bf16.msra.mxu0 0
        %884 = vmatprep.subr.bf16.mxu0 0
        %885 = vmatpush1.bf16.msra.mxu0 0
        %886 = vmatprep.subr.bf16.mxu0 0
        %887 = vmatpush1.bf16.msra.mxu0 0
        %888 = vmatprep.subr.bf16.mxu0 0
        %889 = vmatpush1.bf16.msra.mxu0 0
        %890 = vmatprep.subr.bf16.mxu0 0
        %891 = vmatpush1.bf16.msra.mxu0 0
        %892 = vmatprep.subr.bf16.mxu0 0
        %893 = vmatpush1.bf16.msra.mxu0 0
        %894 = vmatprep.subr.bf16.mxu0 0
        %895 = vmatpush1.bf16.msra.mxu0 0
        %896 = vmatprep.subr.bf16.mxu0 0
        %897 = vmatpush1.bf16.msra.mxu0 0
        %898 = vmatprep.subr.bf16.mxu0 0
        %899 = vmatpush1.bf16.msra.mxu0 0
        %900 = vmatprep.mubr.bf16.mxu0 0
        %901 = vmatmul.mubr.bf16.gmra.mrb[0].mxu0 %v813
        %v902 = vpop.f32.mrb[0].mxu0
        %v903 = vadd.f32 0.0, %v902
        %v904 = vpop.f32.mrb[0].mxu0
        %v905 = vadd.f32 0.0, %v904
        %v906 = vpop.f32.mrb[0].mxu0
        %v907 = vpop.f32.mrb[0].mxu0
        %908 = vdwg.mxu0
        %v909 = vadd.f32 %v791, %v862
        %v910 = vadd.f32 %v792, %v864
        %v911 = vadd.f32 %v793, %v903
        %v912 = vadd.f32 %v794, %v905
        %913 = vrot.lane.b32.xlu0 %v201, 104
        %v914 = vpop.permute.xlu0 %913
        %915 = vrot.lane.b32.xlu0 %v213, 92
        %v916 = vpop.permute.xlu0 %915
        %917 = vrot.lane.b32.xlu0 %v221, 92
        %v918 = vpop.permute.xlu0 %917
        %919 = vrot.lane.b32.xlu0 %v220, 92
        %v920 = vpop.permute.xlu0 %919
        %921 = vrot.lane.b32.xlu0 %v222, 92
        %v922 = vpop.permute.xlu0 %921
        %923 = vrot.lane.b32.xlu0 %v229, 92
        %v924 = vpop.permute.xlu0 %923
        %vm925 = vcmask 752640
        %v926 = vsel %vm925, %v916, %v918
        %v927 = vsel %vm925, %v918, %v920
        %v928 = vsel %vm925, %v920, %v922
        %v929 = vsel %vm925, %v922, %v924
        %v931 = vsel %vm245, %v914, 0
        %v934 = vsel %vm249, %v926, 0
        %v937 = vsel %vm249, %v927, 0
        %v940 = vsel %vm249, %v928, 0
        %v943 = vsel %vm249, %v929, 0
        %945 = vmatprep.subr.bf16.mxu0 %v937
        %946 = vmatpush1.bf16.msra.mxu0 %v934
        %947 = vmatprep.subr.bf16.mxu0 0
        %948 = vmatpush1.bf16.msra.mxu0 0
        %949 = vmatprep.subr.bf16.mxu0 0
        %950 = vmatpush1.bf16.msra.mxu0 0
        %951 = vmatprep.subr.bf16.mxu0 0
        %952 = vmatpush1.bf16.msra.mxu0 0
        %953 = vmatprep.subr.bf16.mxu0 0
        %954 = vmatpush1.bf16.msra.mxu0 0
        %955 = vmatprep.subr.bf16.mxu0 0
        %956 = vmatpush1.bf16.msra.mxu0 0
        %957 = vmatprep.subr.bf16.mxu0 0
        %958 = vmatpush1.bf16.msra.mxu0 0
        %959 = vmatprep.subr.bf16.mxu0 0
        %960 = vmatpush1.bf16.msra.mxu0 0
        %961 = vmatprep.subr.bf16.mxu0 0
        %962 = vmatpush1.bf16.msra.mxu0 0
        %963 = vmatprep.subr.bf16.mxu0 0
        %964 = vmatpush1.bf16.msra.mxu0 0
        %965 = vmatprep.subr.bf16.mxu0 0
        %966 = vmatpush1.bf16.msra.mxu0 0
        %967 = vmatprep.subr.bf16.mxu0 0
        %968 = vmatpush1.bf16.msra.mxu0 0
        %969 = vmatprep.subr.bf16.mxu0 0
        %970 = vmatpush1.bf16.msra.mxu0 0
        %971 = vmatprep.subr.bf16.mxu0 0
        %972 = vmatpush1.bf16.msra.mxu0 0
        %973 = vmatprep.subr.bf16.mxu0 0
        %974 = vmatpush1.bf16.msra.mxu0 0
        %975 = vmatprep.subr.bf16.mxu0 0
        %976 = vmatpush1.bf16.msra.mxu0 0
        %977 = vmatprep.mubr.bf16.mxu0 0
        %978 = vmatmul.mubr.bf16.gmra.mrb[0].mxu0 %v931
        %v979 = vpop.f32.mrb[0].mxu0
        %v980 = vadd.f32 0.0, %v979
        %v981 = vpop.f32.mrb[0].mxu0
        %v982 = vadd.f32 0.0, %v981
        %v983 = vpop.f32.mrb[0].mxu0
        %v984 = vpop.f32.mrb[0].mxu0
        %985 = vdwg.mxu0
        %986 = vmatprep.subr.bf16.mxu0 %v943
        %987 = vmatpush1.bf16.msra.mxu0 %v940
        %988 = vmatprep.subr.bf16.mxu0 0
        %989 = vmatpush1.bf16.msra.mxu0 0
        %990 = vmatprep.subr.bf16.mxu0 0
        %991 = vmatpush1.bf16.msra.mxu0 0
        %992 = vmatprep.subr.bf16.mxu0 0
        %993 = vmatpush1.bf16.msra.mxu0 0
        %994 = vmatprep.subr.bf16.mxu0 0
        %995 = vmatpush1.bf16.msra.mxu0 0
        %996 = vmatprep.subr.bf16.mxu0 0
        %997 = vmatpush1.bf16.msra.mxu0 0
        %998 = vmatprep.subr.bf16.mxu0 0
        %999 = vmatpush1.bf16.msra.mxu0 0
        %1000 = vmatprep.subr.bf16.mxu0 0
        %1001 = vmatpush1.bf16.msra.mxu0 0
        %1002 = vmatprep.subr.bf16.mxu0 0
        %1003 = vmatpush1.bf16.msra.mxu0 0
        %1004 = vmatprep.subr.bf16.mxu0 0
        %1005 = vmatpush1.bf16.msra.mxu0 0
        %1006 = vmatprep.subr.bf16.mxu0 0
        %1007 = vmatpush1.bf16.msra.mxu0 0
        %1008 = vmatprep.subr.bf16.mxu0 0
        %1009 = vmatpush1.bf16.msra.mxu0 0
        %1010 = vmatprep.subr.bf16.mxu0 0
        %1011 = vmatpush1.bf16.msra.mxu0 0
        %1012 = vmatprep.subr.bf16.mxu0 0
        %1013 = vmatpush1.bf16.msra.mxu0 0
        %1014 = vmatprep.subr.bf16.mxu0 0
        %1015 = vmatpush1.bf16.msra.mxu0 0
        %1016 = vmatprep.subr.bf16.mxu0 0
        %1017 = vmatpush1.bf16.msra.mxu0 0
        %1018 = vmatprep.mubr.bf16.mxu0 0
        %1019 = vmatmul.mubr.bf16.gmra.mrb[0].mxu0 %v931
        %v1020 = vpop.f32.mrb[0].mxu0
        %v1021 = vadd.f32 0.0, %v1020
        %v1022 = vpop.f32.mrb[0].mxu0
        %v1023 = vadd.f32 0.0, %v1022
        %v1024 = vpop.f32.mrb[0].mxu0
        %v1025 = vpop.f32.mrb[0].mxu0
        %1026 = vdwg.mxu0
        %v1027 = vadd.f32 %v909, %v980
        %v1028 = vadd.f32 %v910, %v982
        %v1029 = vadd.f32 %v911, %v1021
        %v1030 = vadd.f32 %v912, %v1023
        %1031 = vrot.lane.b32.xlu0 %v201, 100
        %v1032 = vpop.permute.xlu0 %1031
        %1033 = vrot.lane.b32.xlu0 %v213, 91
        %v1034 = vpop.permute.xlu0 %1033
        %1035 = vrot.lane.b32.xlu0 %v221, 91
        %v1036 = vpop.permute.xlu0 %1035
        %1037 = vrot.lane.b32.xlu0 %v220, 91
        %v1038 = vpop.permute.xlu0 %1037
        %1039 = vrot.lane.b32.xlu0 %v222, 91
        %v1040 = vpop.permute.xlu0 %1039
        %1041 = vrot.lane.b32.xlu0 %v229, 91
        %v1042 = vpop.permute.xlu0 %1041
        %vm1043 = vcmask 744448
        %v1044 = vsel %vm1043, %v1034, %v1036
        %v1045 = vsel %vm1043, %v1036, %v1038
        %v1046 = vsel %vm1043, %v1038, %v1040
        %v1047 = vsel %vm1043, %v1040, %v1042
        %v1049 = vsel %vm245, %v1032, 0
        %v1052 = vsel %vm249, %v1044, 0
        %v1055 = vsel %vm249, %v1045, 0
        %v1058 = vsel %vm249, %v1046, 0
        %v1061 = vsel %vm249, %v1047, 0
        %1063 = vmatprep.subr.bf16.mxu0 %v1055
        %1064 = vmatpush1.bf16.msra.mxu0 %v1052
        %1065 = vmatprep.subr.bf16.mxu0 0
        %1066 = vmatpush1.bf16.msra.mxu0 0
        %1067 = vmatprep.subr.bf16.mxu0 0
        %1068 = vmatpush1.bf16.msra.mxu0 0
        %1069 = vmatprep.subr.bf16.mxu0 0
        %1070 = vmatpush1.bf16.msra.mxu0 0
        %1071 = vmatprep.subr.bf16.mxu0 0
        %1072 = vmatpush1.bf16.msra.mxu0 0
        %1073 = vmatprep.subr.bf16.mxu0 0
        %1074 = vmatpush1.bf16.msra.mxu0 0
        %1075 = vmatprep.subr.bf16.mxu0 0
        %1076 = vmatpush1.bf16.msra.mxu0 0
        %1077 = vmatprep.subr.bf16.mxu0 0
        %1078 = vmatpush1.bf16.msra.mxu0 0
        %1079 = vmatprep.subr.bf16.mxu0 0
        %1080 = vmatpush1.bf16.msra.mxu0 0
        %1081 = vmatprep.subr.bf16.mxu0 0
        %1082 = vmatpush1.bf16.msra.mxu0 0
        %1083 = vmatprep.subr.bf16.mxu0 0
        %1084 = vmatpush1.bf16.msra.mxu0 0
        %1085 = vmatprep.subr.bf16.mxu0 0
        %1086 = vmatpush1.bf16.msra.mxu0 0
        %1087 = vmatprep.subr.bf16.mxu0 0
        %1088 = vmatpush1.bf16.msra.mxu0 0
        %1089 = vmatprep.subr.bf16.mxu0 0
        %1090 = vmatpush1.bf16.msra.mxu0 0
        %1091 = vmatprep.subr.bf16.mxu0 0
        %1092 = vmatpush1.bf16.msra.mxu0 0
        %1093 = vmatprep.subr.bf16.mxu0 0
        %1094 = vmatpush1.bf16.msra.mxu0 0
        %1095 = vmatprep.mubr.bf16.mxu0 0
        %1096 = vmatmul.mubr.bf16.gmra.mrb[0].mxu0 %v1049
        %v1097 = vpop.f32.mrb[0].mxu0
        %v1098 = vadd.f32 0.0, %v1097
        %v1099 = vpop.f32.mrb[0].mxu0
        %v1100 = vadd.f32 0.0, %v1099
        %v1101 = vpop.f32.mrb[0].mxu0
        %v1102 = vpop.f32.mrb[0].mxu0
        %1103 = vdwg.mxu0
        %1104 = vmatprep.subr.bf16.mxu0 %v1061
        %1105 = vmatpush1.bf16.msra.mxu0 %v1058
        %1106 = vmatprep.subr.bf16.mxu0 0
        %1107 = vmatpush1.bf16.msra.mxu0 0
        %1108 = vmatprep.subr.bf16.mxu0 0
        %1109 = vmatpush1.bf16.msra.mxu0 0
        %1110 = vmatprep.subr.bf16.mxu0 0
        %1111 = vmatpush1.bf16.msra.mxu0 0
        %1112 = vmatprep.subr.bf16.mxu0 0
        %1113 = vmatpush1.bf16.msra.mxu0 0
        %1114 = vmatprep.subr.bf16.mxu0 0
        %1115 = vmatpush1.bf16.msra.mxu0 0
        %1116 = vmatprep.subr.bf16.mxu0 0
        %1117 = vmatpush1.bf16.msra.mxu0 0
        %1118 = vmatprep.subr.bf16.mxu0 0
        %1119 = vmatpush1.bf16.msra.mxu0 0
        %1120 = vmatprep.subr.bf16.mxu0 0
        %1121 = vmatpush1.bf16.msra.mxu0 0
        %1122 = vmatprep.subr.bf16.mxu0 0
        %1123 = vmatpush1.bf16.msra.mxu0 0
        %1124 = vmatprep.subr.bf16.mxu0 0
        %1125 = vmatpush1.bf16.msra.mxu0 0
        %1126 = vmatprep.subr.bf16.mxu0 0
        %1127 = vmatpush1.bf16.msra.mxu0 0
        %1128 = vmatprep.subr.bf16.mxu0 0
        %1129 = vmatpush1.bf16.msra.mxu0 0
        %1130 = vmatprep.subr.bf16.mxu0 0
        %1131 = vmatpush1.bf16.msra.mxu0 0
        %1132 = vmatprep.subr.bf16.mxu0 0
        %1133 = vmatpush1.bf16.msra.mxu0 0
        %1134 = vmatprep.subr.bf16.mxu0 0
        %1135 = vmatpush1.bf16.msra.mxu0 0
        %1136 = vmatprep.mubr.bf16.mxu0 0
        %1137 = vmatmul.mubr.bf16.gmra.mrb[0].mxu0 %v1049
        %v1138 = vpop.f32.mrb[0].mxu0
        %v1139 = vadd.f32 0.0, %v1138
        %v1140 = vpop.f32.mrb[0].mxu0
        %v1141 = vadd.f32 0.0, %v1140
        %v1142 = vpop.f32.mrb[0].mxu0
        %v1143 = vpop.f32.mrb[0].mxu0
        %1144 = vdwg.mxu0
        %v1145 = vadd.f32 %v1027, %v1098
        %v1146 = vadd.f32 %v1028, %v1100
        %v1147 = vadd.f32 %v1029, %v1139
        %v1148 = vadd.f32 %v1030, %v1141
        %1149 = vrot.lane.b32.xlu0 %v201, 96
        %v1150 = vpop.permute.xlu0 %1149
        %1151 = vrot.lane.b32.xlu0 %v213, 90
        %v1152 = vpop.permute.xlu0 %1151
        %1153 = vrot.lane.b32.xlu0 %v221, 90
        %v1154 = vpop.permute.xlu0 %1153
        %1155 = vrot.lane.b32.xlu0 %v220, 90
        %v1156 = vpop.permute.xlu0 %1155
        %1157 = vrot.lane.b32.xlu0 %v222, 90
        %v1158 = vpop.permute.xlu0 %1157
        %1159 = vrot.lane.b32.xlu0 %v229, 90
        %v1160 = vpop.permute.xlu0 %1159
        %vm1161 = vcmask 736256
        %v1162 = vsel %vm1161, %v1152, %v1154
        %v1163 = vsel %vm1161, %v1154, %v1156
        %v1164 = vsel %vm1161, %v1156, %v1158
        %v1165 = vsel %vm1161, %v1158, %v1160
        %v1167 = vsel %vm245, %v1150, 0
        %v1170 = vsel %vm249, %v1162, 0
        %v1173 = vsel %vm249, %v1163, 0
        %v1176 = vsel %vm249, %v1164, 0
        %v1179 = vsel %vm249, %v1165, 0
        %1181 = vmatprep.subr.bf16.mxu0 %v1173
        %1182 = vmatpush1.bf16.msra.mxu0 %v1170
        %1183 = vmatprep.subr.bf16.mxu0 0
        %1184 = vmatpush1.bf16.msra.mxu0 0
        %1185 = vmatprep.subr.bf16.mxu0 0
        %1186 = vmatpush1.bf16.msra.mxu0 0
        %1187 = vmatprep.subr.bf16.mxu0 0
        %1188 = vmatpush1.bf16.msra.mxu0 0
        %1189 = vmatprep.subr.bf16.mxu0 0
        %1190 = vmatpush1.bf16.msra.mxu0 0
        %1191 = vmatprep.subr.bf16.mxu0 0
        %1192 = vmatpush1.bf16.msra.mxu0 0
        %1193 = vmatprep.subr.bf16.mxu0 0
        %1194 = vmatpush1.bf16.msra.mxu0 0
        %1195 = vmatprep.subr.bf16.mxu0 0
        %1196 = vmatpush1.bf16.msra.mxu0 0
        %1197 = vmatprep.subr.bf16.mxu0 0
        %1198 = vmatpush1.bf16.msra.mxu0 0
        %1199 = vmatprep.subr.bf16.mxu0 0
        %1200 = vmatpush1.bf16.msra.mxu0 0
        %1201 = vmatprep.subr.bf16.mxu0 0
        %1202 = vmatpush1.bf16.msra.mxu0 0
        %1203 = vmatprep.subr.bf16.mxu0 0
        %1204 = vmatpush1.bf16.msra.mxu0 0
        %1205 = vmatprep.subr.bf16.mxu0 0
        %1206 = vmatpush1.bf16.msra.mxu0 0
        %1207 = vmatprep.subr.bf16.mxu0 0
        %1208 = vmatpush1.bf16.msra.mxu0 0
        %1209 = vmatprep.subr.bf16.mxu0 0
        %1210 = vmatpush1.bf16.msra.mxu0 0
        %1211 = vmatprep.subr.bf16.mxu0 0
        %1212 = vmatpush1.bf16.msra.mxu0 0
        %1213 = vmatprep.mubr.bf16.mxu0 0
        %1214 = vmatmul.mubr.bf16.gmra.mrb[0].mxu0 %v1167
        %v1215 = vpop.f32.mrb[0].mxu0
        %v1216 = vadd.f32 0.0, %v1215
        %v1217 = vpop.f32.mrb[0].mxu0
        %v1218 = vadd.f32 0.0, %v1217
        %v1219 = vpop.f32.mrb[0].mxu0
        %v1220 = vpop.f32.mrb[0].mxu0
        %1221 = vdwg.mxu0
        %1222 = vmatprep.subr.bf16.mxu0 %v1179
        %1223 = vmatpush1.bf16.msra.mxu0 %v1176
        %1224 = vmatprep.subr.bf16.mxu0 0
        %1225 = vmatpush1.bf16.msra.mxu0 0
        %1226 = vmatprep.subr.bf16.mxu0 0
        %1227 = vmatpush1.bf16.msra.mxu0 0
        %1228 = vmatprep.subr.bf16.mxu0 0
        %1229 = vmatpush1.bf16.msra.mxu0 0
        %1230 = vmatprep.subr.bf16.mxu0 0
        %1231 = vmatpush1.bf16.msra.mxu0 0
        %1232 = vmatprep.subr.bf16.mxu0 0
        %1233 = vmatpush1.bf16.msra.mxu0 0
        %1234 = vmatprep.subr.bf16.mxu0 0
        %1235 = vmatpush1.bf16.msra.mxu0 0
        %1236 = vmatprep.subr.bf16.mxu0 0
        %1237 = vmatpush1.bf16.msra.mxu0 0
        %1238 = vmatprep.subr.bf16.mxu0 0
        %1239 = vmatpush1.bf16.msra.mxu0 0
        %1240 = vmatprep.subr.bf16.mxu0 0
        %1241 = vmatpush1.bf16.msra.mxu0 0
        %1242 = vmatprep.subr.bf16.mxu0 0
        %1243 = vmatpush1.bf16.msra.mxu0 0
        %1244 = vmatprep.subr.bf16.mxu0 0
        %1245 = vmatpush1.bf16.msra.mxu0 0
        %1246 = vmatprep.subr.bf16.mxu0 0
        %1247 = vmatpush1.bf16.msra.mxu0 0
        %1248 = vmatprep.subr.bf16.mxu0 0
        %1249 = vmatpush1.bf16.msra.mxu0 0
        %1250 = vmatprep.subr.bf16.mxu0 0
        %1251 = vmatpush1.bf16.msra.mxu0 0
        %1252 = vmatprep.subr.bf16.mxu0 0
        %1253 = vmatpush1.bf16.msra.mxu0 0
        %1254 = vmatprep.mubr.bf16.mxu0 0
        %1255 = vmatmul.mubr.bf16.gmra.mrb[0].mxu0 %v1167
        %v1256 = vpop.f32.mrb[0].mxu0
        %v1257 = vadd.f32 0.0, %v1256
        %v1258 = vpop.f32.mrb[0].mxu0
        %v1259 = vadd.f32 0.0, %v1258
        %v1260 = vpop.f32.mrb[0].mxu0
        %v1261 = vpop.f32.mrb[0].mxu0
        %1262 = vdwg.mxu0
        %v1263 = vadd.f32 %v1145, %v1216
        %v1264 = vadd.f32 %v1146, %v1218
        %v1265 = vadd.f32 %v1147, %v1257
        %v1266 = vadd.f32 %v1148, %v1259
        %v1267 = vld [vmem:[%s2] sm:$0xff]
        %1269 = vset.pattern.permute.xlu0 0
        %1270 = vperm.xlu0 %1269, %v1267
        %v1271 = vpop.permute.xlu0 %1270
        %v1273 = vmul.f32 %v1263, %v1271
        %v1274 = vmul.f32 %v1264, %v1271
        %v1275 = vmul.f32 %v1265, %v1271
        %v1276 = vmul.f32 %v1266, %v1271
        %v1277 = vld [vmem:[%s3] sm:$0xff]
        %1279 = vset.pattern.permute.xlu0 0
        %1280 = vperm.xlu0 %1279, %v1277
        %v1281 = vpop.permute.xlu0 %1280
        %v1283 = vadd.f32 %v1273, %v1281
        %v1284 = vadd.f32 %v1274, %v1281
        %v1285 = vadd.f32 %v1275, %v1281
        %v1286 = vadd.f32 %v1276, %v1281
        %v1287 = vmax.f32 %v1283, 0.0
        %v1288 = vmax.f32 %v1284, 0.0
        %v1289 = vmax.f32 %v1285, 0.0
        %v1290 = vmax.f32 %v1286, 0.0
        %1291 = vst [vmem:[%s188] sm:$0xff] %v1287
        %1292 = vst [vmem:[%s188 + $0x8] sm:$0xff] %v1288
        %1293 = vst [vmem:[%s188 + $0x10] sm:$0xff] %v1289
        %1294 = vst [vmem:[%s188 + $0x18] sm:$0xff] %v1290
        %s1295 = sand.u32 %s111, 1
        %s1296 = scalar_lea.sflag [#allocation4], %s1295
        %s1297 = sand.u32 %s111, 1
        %s1298 = smul.addr %s1297, 32
        %s1299 = scalar_lea.vmem [#allocation5], %s1298
        // Predicated region
        $region41: #{tpu_custom_call.1} parent=35 // pred_check
          %p1300 = pneg %p121
        $region42: #{tpu_custom_call.1} parent=35 // pred_check_branch
          %1302 = sbr.rel (%p1300) target = $region44
        $region43: #{tpu_custom_call.1} parent=35 // pred_region
          %s1303 = smul.u32 4, %s19
          %s1305 = ssub.s32 512, 512
          %1306 = vsyncadd %s1296, %s1305
          %s1307 = smul.addr %s1303, 128
          %s1308 = scalar_lea.hbm %s4, %s1307
          %s1310 = sshll.u32 %s1299, 4
          %s1311 = int_to_ptr.vmem [resolvable:$true] %s1310
          %1313 = dma.vmem_to_hbm [thread:$0]  %s1311, 512, %s1308, %s1296
        $region44: #{tpu_custom_call.1} parent=35 // pred_fallthru
          _
      $region36: #{tpu_custom_call.1} parent=5 // pred_fallthru
        _
      %p1314 = scmp.le.s32.totalorder 2, %s14
      // Predicated region
      $region45: #{tpu_custom_call.1} parent=5 // pred_check
        %p1315 = pneg %p1314
      $region46: #{tpu_custom_call.1} parent=5 // pred_check_branch
        %1317 = sbr.rel (%p1315) target = $region48
      $region47: #{tpu_custom_call.1} parent=5 // pred_region
        %s1318 = ssub.s32 %s14, 2
        // Predicated region
        $region49: #{tpu_custom_call.1} parent=47 // pred_check
          %p1319 = pneg %p127
        $region50: #{tpu_custom_call.1} parent=47 // pred_check_branch
          %1321 = sbr.rel (%p1319) target = $region52
        $region51: #{tpu_custom_call.1} parent=47 // pred_region
          %s1322 = sand.u32 %s112, 1
          %s1323 = scalar_lea.sflag [#allocation4], %s1322
          %s1324 = sand.u32 %s112, 1
          %s1325 = smul.addr %s1324, 32
          %s1326 = scalar_lea.vmem [#allocation5], %s1325
          %1327 = dma.done %s1323, 512
        $region52: #{tpu_custom_call.1} parent=47 // pred_fallthru
          _
      $region48: #{tpu_custom_call.1} parent=5 // pred_fallthru
        _
    $region6: #{tpu_custom_call.1} parent=1 // loop_footer
      %s18 = sadd.s32 1, %s14
    $region7: #{tpu_custom_call.1} parent=1 // loop_footer_branch
      %13 = sbr.rel target = $region3
    $region8: #{tpu_custom_call.1} parent=1 // loop_exit
      _
    %1328 = vsyncpa [#allocation3], 1
    %s1329 = scalar_lea.sflag [#allocation3], 1
    %1330 = vsyncpa %s1329, 1
    %1331 = vsyncpa [#allocation4], 1
    %s1332 = scalar_lea.sflag [#allocation4], 1
    %1333 = vsyncpa %s1332, 1

</llo_original>
